<compile_context>
chip_gen: v7x
topology: tpu7x:2x2x1
jax: 0.10.0
libtpu: 0.0.40
codegen_flags: <defaults>
</compile_context>

<pallas_src>
import jax
import jax.numpy as jnp
from jax.experimental import pallas as pl
from jax.experimental.pallas import tpu as pltpu

INPUT_SIZE = 784
HIDDEN = 50
NUM_CLASSES = 10
BATCH = 64

LANE = 128   # lane width of a vreg
SUBLANE = 8  # sublane height of a vreg


def _round_up(n, m):
    return (n + m - 1) // m * m


def mlp_kernel(x_ref, w1_ref, b1_ref, w2_ref, b2_ref, o_ref):
    # fc1 (bf16 operands, f32 accumulation) + bias + ReLU
    h = jnp.dot(x_ref[...], w1_ref[...], preferred_element_type=jnp.float32)
    h = jnp.maximum(h + b1_ref[...], 0.0)          # (TM, 128) + (1, 128)
    # fc2 (cast activations back to bf16 for the MXU, accumulate in f32)
    out = jnp.dot(h.astype(jnp.bfloat16), w2_ref[...],
                  preferred_element_type=jnp.float32)
    o_ref[...] = (out + b2_ref[...]).astype(o_ref.dtype)


def nn_forward(x, w1, b1, w2, b2, *, tm=512):
    """Forward pass of the MLP.

    x : (B, 784) f32
    w1: (784, 50) f32   b1: (1, 50) f32
    w2: (50, 10)  f32   b2: (1, 10) f32
    Returns (B, 10) f32.
    """
    B, K = x.shape
    H = w1.shape[1]
    C = w2.shape[1]
    Hp = _round_up(H, LANE)          # 50  -> 128 (lane-dense hidden)
    Cp = _round_up(C, LANE)          # 10  -> 128 (lane-dense output)

    # Batch tile: large enough to amortize per-step overhead, clamped to B.
    # (tm=512 budgeted for v7x's smaller VMEM; trivially fits here.)
    tm = min(tm, _round_up(B, SUBLANE))
    Bp = _round_up(B, tm)

    # Zero-pad + cast operands. Padded hidden lanes stay exactly 0 through
    # bias=0 and ReLU, and padded output lanes are sliced off below.
    xb = jnp.zeros((Bp, K), jnp.bfloat16).at[:B, :].set(x.astype(jnp.bfloat16))
    w1b = jnp.zeros((K, Hp), jnp.bfloat16).at[:, :H].set(w1.astype(jnp.bfloat16))
    b1p = jnp.zeros((1, Hp), jnp.float32).at[:, :H].set(b1.astype(jnp.float32))
    w2b = jnp.zeros((Hp, Cp), jnp.bfloat16).at[:H, :C].set(w2.astype(jnp.bfloat16))
    b2p = jnp.zeros((1, Cp), jnp.float32).at[:, :C].set(b2.astype(jnp.float32))

    grid = (Bp // tm,)

    flops = 2 * Bp * K * Hp + 2 * Bp * Hp * Cp
    bytes_accessed = (xb.size * 2 + w1b.size * 2 + w2b.size * 2
                      + b1p.size * 4 + b2p.size * 4 + Bp * Cp * 4)

    out_padded = pl.pallas_call(
        mlp_kernel,
        out_shape=jax.ShapeDtypeStruct((Bp, Cp), jnp.float32),
        grid_spec=pltpu.PrefetchScalarGridSpec(
            num_scalar_prefetch=0,
            grid=grid,
            in_specs=[
                pl.BlockSpec((tm, K), lambda i: (i, 0)),    # x tile per step
                pl.BlockSpec((K, Hp), lambda i: (0, 0)),    # w1 resident
                pl.BlockSpec((1, Hp), lambda i: (0, 0)),    # b1 resident
                pl.BlockSpec((Hp, Cp), lambda i: (0, 0)),   # w2 resident
                pl.BlockSpec((1, Cp), lambda i: (0, 0)),    # b2 resident
            ],
            out_specs=pl.BlockSpec((tm, Cp), lambda i: (i, 0)),
        ),
        compiler_params=pltpu.CompilerParams(
            dimension_semantics=("parallel",)),
        cost_estimate=pl.CostEstimate(
            flops=flops, transcendentals=0, bytes_accessed=bytes_accessed),
    )(xb, w1b, b1p, w2b, b2p)

    return out_padded[:B, :C]


def init_params(key):
    """Deterministic init mimicking PyTorch nn.Linear default U(-1/sqrt(fan_in), +)."""
    k1, k2, k3, k4 = jax.random.split(key, 4)
    lim1 = 1.0 / jnp.sqrt(jnp.float32(INPUT_SIZE))
    lim2 = 1.0 / jnp.sqrt(jnp.float32(HIDDEN))
    # Stored as (in, out) — transpose of PyTorch's (out, in) weight layout.
    w1 = jax.random.uniform(k1, (INPUT_SIZE, HIDDEN), jnp.float32, -lim1, lim1)
    b1 = jax.random.uniform(k2, (1, HIDDEN), jnp.float32, -lim1, lim1)
    w2 = jax.random.uniform(k3, (HIDDEN, NUM_CLASSES), jnp.float32, -lim2, lim2)
    b2 = jax.random.uniform(k4, (1, NUM_CLASSES), jnp.float32, -lim2, lim2)
    return w1, b1, w2, b2


if __name__ == "__main__":
    key = jax.random.PRNGKey(0)
    kx, kp = jax.random.split(key)
    x = jax.random.normal(kx, (BATCH, INPUT_SIZE), jnp.float32)
    w1, b1, w2, b2 = init_params(kp)

    out = nn_forward(x, w1, b1, w2, b2)
    out = jax.block_until_ready(out)

    # Reference check against plain JAX f32 (same math as the PyTorch forward).
    # Kernel uses bf16 operands with f32 accumulation, so allow bf16-level error.
    ref = jnp.maximum(x @ w1 + b1, 0.0) @ w2 + b2
    assert out.shape == (BATCH, NUM_CLASSES)
    assert jnp.allclose(out, ref, atol=2e-2, rtol=2e-2), \
        f"max abs err {jnp.max(jnp.abs(out - ref))}"

    print("KERNEL_OK")
</pallas_src>

<mosaic_0001>
module attributes {stable_mosaic.version = 11 : i64} {
  func.func @mlp_kernel(%arg0: i32, %arg1: memref<64x784xbf16, #tpu.memory_space<vmem>>, %arg2: memref<784x128xbf16, #tpu.memory_space<vmem>>, %arg3: memref<1x128xf32, #tpu.memory_space<vmem>>, %arg4: memref<128x128xbf16, #tpu.memory_space<vmem>>, %arg5: memref<1x128xf32, #tpu.memory_space<vmem>>, %arg6: memref<64x128xf32, #tpu.memory_space<vmem>>) attributes {dimension_semantics = [#tpu.dimension_semantics<parallel>], iteration_bounds = array<i64: 1>, scalar_prefetch = 0 : i64, scratch_operands = 0 : i64, tpu.core_type = #tpu.core_type<tc>, window_params = [{transform_indices = @transform_0, window_bounds = array<i64: 64, 784>}, {pipeline_mode = #tpu.pipeline_mode<synchronous>, transform_indices = @transform_1, window_bounds = array<i64: 784, 128>}, {pipeline_mode = #tpu.pipeline_mode<synchronous>, transform_indices = @transform_2, window_bounds = array<i64: 1, 128>}, {pipeline_mode = #tpu.pipeline_mode<synchronous>, transform_indices = @transform_3, window_bounds = array<i64: 128, 128>}, {pipeline_mode = #tpu.pipeline_mode<synchronous>, transform_indices = @transform_4, window_bounds = array<i64: 1, 128>}, {transform_indices = @transform_5, window_bounds = array<i64: 64, 128>}]} {
    %c0 = arith.constant 0 : index
    %c0_0 = arith.constant 0 : index
    %0 = vector.load %arg1[%c0, %c0_0] : memref<64x784xbf16, #tpu.memory_space<vmem>>, vector<64x784xbf16>
    %c0_1 = arith.constant 0 : index
    %c0_2 = arith.constant 0 : index
    %1 = vector.load %arg2[%c0_1, %c0_2] : memref<784x128xbf16, #tpu.memory_space<vmem>>, vector<784x128xbf16>
    %cst = arith.constant dense<0.000000e+00> : vector<64x128xf32>
    %2 = tpu.matmul %0, %1, %cst {dimension_numbers = #tpu.dot_dimension_numbers<[1], [0], [0], [1], [0, 0, 1, 1], [], []>} : vector<64x784xbf16>, vector<784x128xbf16>, vector<64x128xf32> -> vector<64x128xf32>
    %c0_3 = arith.constant 0 : index
    %c0_4 = arith.constant 0 : index
    %3 = vector.load %arg3[%c0_3, %c0_4] : memref<1x128xf32, #tpu.memory_space<vmem>>, vector<1x128xf32>
    %4 = vector.broadcast %3 : vector<1x128xf32> to vector<64x128xf32>
    %5 = arith.addf %2, %4 : vector<64x128xf32>
    %cst_5 = arith.constant 0.000000e+00 : f32
    %6 = vector.broadcast %cst_5 : f32 to vector<64x128xf32>
    %7 = arith.maximumf %5, %6 : vector<64x128xf32>
    %8 = arith.truncf %7 : vector<64x128xf32> to vector<64x128xbf16>
    %c0_6 = arith.constant 0 : index
    %c0_7 = arith.constant 0 : index
    %9 = vector.load %arg4[%c0_6, %c0_7] : memref<128x128xbf16, #tpu.memory_space<vmem>>, vector<128x128xbf16>
    %cst_8 = arith.constant dense<0.000000e+00> : vector<64x128xf32>
    %10 = tpu.matmul %8, %9, %cst_8 {dimension_numbers = #tpu.dot_dimension_numbers<[1], [0], [0], [1], [0, 0, 1, 1], [], []>} : vector<64x128xbf16>, vector<128x128xbf16>, vector<64x128xf32> -> vector<64x128xf32>
    %c0_9 = arith.constant 0 : index
    %c0_10 = arith.constant 0 : index
    %11 = vector.load %arg5[%c0_9, %c0_10] : memref<1x128xf32, #tpu.memory_space<vmem>>, vector<1x128xf32>
    %12 = vector.broadcast %11 : vector<1x128xf32> to vector<64x128xf32>
    %13 = arith.addf %10, %12 : vector<64x128xf32>
    %c0_11 = arith.constant 0 : index
    %c0_12 = arith.constant 0 : index
    %14 = vector.load %arg6[%c0_11, %c0_12] : memref<64x128xf32, #tpu.memory_space<vmem>>, vector<64x128xf32>
    tpu.vector_store %arg6[%c0_11, %c0_12], %13 {strides = array<i32>} : memref<64x128xf32, #tpu.memory_space<vmem>>, vector<64x128xf32>,
    return
  }
  func.func @transform_0(%arg0: i32) -> (i32, i32) {
    %c0_i32 = arith.constant 0 : i32
    %c0_i32_0 = arith.constant 0 : i32
    return %arg0, %c0_i32 : i32, i32
  }
  func.func @transform_1(%arg0: i32) -> (i32, i32) {
    %c0_i32 = arith.constant 0 : i32
    %c0_i32_0 = arith.constant 0 : i32
    %c0_i32_1 = arith.constant 0 : i32
    return %c0_i32, %c0_i32_0 : i32, i32
  }
  func.func @transform_2(%arg0: i32) -> (i32, i32) {
    %c0_i32 = arith.constant 0 : i32
    %c0_i32_0 = arith.constant 0 : i32
    %c0_i32_1 = arith.constant 0 : i32
    return %c0_i32, %c0_i32_0 : i32, i32
  }
  func.func @transform_3(%arg0: i32) -> (i32, i32) {
    %c0_i32 = arith.constant 0 : i32
    %c0_i32_0 = arith.constant 0 : i32
    %c0_i32_1 = arith.constant 0 : i32
    return %c0_i32, %c0_i32_0 : i32, i32
  }
  func.func @transform_4(%arg0: i32) -> (i32, i32) {
    %c0_i32 = arith.constant 0 : i32
    %c0_i32_0 = arith.constant 0 : i32
    %c0_i32_1 = arith.constant 0 : i32
    return %c0_i32, %c0_i32_0 : i32, i32
  }
  func.func @transform_5(%arg0: i32) -> (i32, i32) {
    %c0_i32 = arith.constant 0 : i32
    %c0_i32_0 = arith.constant 0 : i32
    return %arg0, %c0_i32 : i32, i32
  }
}

</mosaic_0001>

<llo_original>
// kernel: tpu_custom_call.1
$region0: #{tpu_custom_call.1}
  #allocation0 [shape = 'u32[]', space=smem, size = 0x4, offset = 0x4, fixed_abs, tag = 'smem constant byte address 0x4 - core index']
  #allocation1 [shape = 'u32[144,128]{1,0:T(1,128)}', space=vmem, size = 0x12000, scoped, tag = 'internal scratch']
  %s0 = inlined_call_operand.hbm [shape: bf16[64,784], index: 0, kind: input, shape index: {}]
  %s1 = inlined_call_operand.hbm [shape: bf16[784,128], index: 1, kind: input, shape index: {}]
  %s2 = inlined_call_operand.vmem [shape: f32[1,128], index: 2, kind: input, shape index: {}]
  %s3 = inlined_call_operand.hbm [shape: bf16[128,128], index: 3, kind: input, shape index: {}]
  %s4 = inlined_call_operand.vmem [shape: f32[1,128], index: 4, kind: input, shape index: {}]
  %s5 = inlined_call_operand.hbm [shape: f32[64,128], index: 5, kind: output, shape index: {}]
  %s6 = sld [smem:[#allocation0]]
  $region42: #{tpu_custom_call.1} parent=0
    _
  %s8 = ssub.s32 1, %s6
  %s9 = scalar_select 0, %s8, %s6
  $region1: #{tpu_custom_call.1} parent=0
    #allocation2 [shape = 'u8[114688]{0}', space=vmem, size = 0x1c000, scoped, tag = 'input window, operand 0, single buffered']
    #allocation3 [shape = 's32[1]{0}', space=sflag, size = 0x4, scoped, tag = 'scoped memory for tpu_custom_call.1']
    #allocation4 [shape = 's32[1]{0}', space=sflag, size = 0x4, scoped, tag = 'scoped memory for tpu_custom_call.1']
    #allocation5 [shape = 'u8[200704]{0}', space=vmem, size = 0x31000, scoped, tag = 'input window, operand 1, single buffered']
    #allocation6 [shape = 's32[1]{0}', space=sflag, size = 0x4, scoped, tag = 'scoped memory for tpu_custom_call.1']
    #allocation7 [shape = 'u8[32768]{0}', space=vmem, size = 0x8000, scoped, tag = 'input window, operand 3, single buffered']
    #allocation8 [shape = 'u8[32768]{0}', space=vmem, size = 0x8000, scoped, tag = 'output window, operand 0, single buffered']
    %10 = vsyncpa [#allocation3], 0
    %11 = vsyncpa [#allocation6], 0
    %12 = vsyncpa [#allocation4], 0
    // Predicated region
    $region2: #{tpu_custom_call.1} parent=1 // pred_check
      _
    $region3: #{tpu_custom_call.1} parent=1 // pred_check_branch
      %14 = sbr.rel (0) target = $region5
    $region4: #{tpu_custom_call.1} parent=1 // pred_region
      %s16 = ssub.s32 3584, 3584
      %17 = vsyncadd [#allocation3], %s16
      %s18 = sshll.u32 [#allocation2], 4
      %s19 = int_to_ptr.vmem [resolvable:$true] %s18
      %24 = dma.hbm_to_vmem [thread:$0]  %s0, 3584, %s19, [#allocation3], 448, 448, 28
    $region5: #{tpu_custom_call.1} parent=1 // pred_fallthru
      _
    // Predicated region
    $region6: #{tpu_custom_call.1} parent=1 // pred_check
      _
    $region7: #{tpu_custom_call.1} parent=1 // pred_check_branch
      %26 = sbr.rel (0) target = $region9
    $region8: #{tpu_custom_call.1} parent=1 // pred_region
      %s28 = ssub.s32 6272, 6272
      %29 = vsyncadd [#allocation6], %s28
      %s30 = sshll.u32 [#allocation5], 4
      %s31 = int_to_ptr.vmem [resolvable:$true] %s30
      %36 = dma.hbm_to_vmem [thread:$0]  %s1, 6272, %s31, [#allocation6], 64, 64, 4
    $region9: #{tpu_custom_call.1} parent=1 // pred_fallthru
      _
    // Predicated region
    $region10: #{tpu_custom_call.1} parent=1 // pred_check
      _
    $region11: #{tpu_custom_call.1} parent=1 // pred_check_branch
      %38 = sbr.rel (0) target = $region13
    $region12: #{tpu_custom_call.1} parent=1 // pred_region
      _
    $region13: #{tpu_custom_call.1} parent=1 // pred_fallthru
      _
    // Predicated region
    $region14: #{tpu_custom_call.1} parent=1 // pred_check
      _
    $region15: #{tpu_custom_call.1} parent=1 // pred_check_branch
      %40 = sbr.rel (0) target = $region17
    $region16: #{tpu_custom_call.1} parent=1 // pred_region
      %s42 = ssub.s32 1024, 1024
      %43 = vsyncadd [#allocation6], %s42
      %s44 = sshll.u32 [#allocation7], 4
      %s45 = int_to_ptr.vmem [resolvable:$true] %s44
      %50 = dma.hbm_to_vmem [thread:$0]  %s3, 1024, %s45, [#allocation6], 64, 64, 4
    $region17: #{tpu_custom_call.1} parent=1 // pred_fallthru
      _
    // Predicated region
    $region18: #{tpu_custom_call.1} parent=1 // pred_check
      _
    $region19: #{tpu_custom_call.1} parent=1 // pred_check_branch
      %52 = sbr.rel (0) target = $region21
    $region20: #{tpu_custom_call.1} parent=1 // pred_region
      _
    $region21: #{tpu_custom_call.1} parent=1 // pred_fallthru
      _
    // Predicated region
    $region22: #{tpu_custom_call.1} parent=1 // pred_check
      _
    $region23: #{tpu_custom_call.1} parent=1 // pred_check_branch
      %54 = sbr.rel (0) target = $region25
    $region24: #{tpu_custom_call.1} parent=1 // pred_region
      %55 = dma.done [#allocation3], 3584
    $region25: #{tpu_custom_call.1} parent=1 // pred_fallthru
      _
    // Predicated region
    $region26: #{tpu_custom_call.1} parent=1 // pred_check
      _
    $region27: #{tpu_custom_call.1} parent=1 // pred_check_branch
      %57 = sbr.rel (0) target = $region29
    $region28: #{tpu_custom_call.1} parent=1 // pred_region
      %58 = dma.done [#allocation6], 6272
    $region29: #{tpu_custom_call.1} parent=1 // pred_fallthru
      _
    // Predicated region
    $region30: #{tpu_custom_call.1} parent=1 // pred_check
      _
    $region31: #{tpu_custom_call.1} parent=1 // pred_check_branch
      %60 = sbr.rel (0) target = $region33
    $region32: #{tpu_custom_call.1} parent=1 // pred_region
      %61 = dma.done [#allocation6], 1024
    $region33: #{tpu_custom_call.1} parent=1 // pred_fallthru
      _
    %v63 = vld [vmem:[#allocation2] sm:$0xff]
    %v64 = vld [vmem:[#allocation2 + $0x8] sm:$0xff]
    %v65 = vld [vmem:[#allocation2 + $0x10] sm:$0xff]
    %v66 = vld [vmem:[#allocation2 + $0x18] sm:$0xf]
    %v67 = vld [vmem:[#allocation2 + $0x1c] sm:$0xff]
    %v68 = vld [vmem:[#allocation2 + $0x24] sm:$0xff]
    %v69 = vld [vmem:[#allocation2 + $0x2c] sm:$0xff]
    %v70 = vld [vmem:[#allocation2 + $0x34] sm:$0xf]
    %v71 = vld [vmem:[#allocation2 + $0x38] sm:$0xff]
    %v72 = vld [vmem:[#allocation2 + $0x40] sm:$0xff]
    %v73 = vld [vmem:[#allocation2 + $0x48] sm:$0xff]
    %v74 = vld [vmem:[#allocation2 + $0x50] sm:$0xf]
    %v75 = vld [vmem:[#allocation2 + $0x54] sm:$0xff]
    %v76 = vld [vmem:[#allocation2 + $0x5c] sm:$0xff]
    %v77 = vld [vmem:[#allocation2 + $0x64] sm:$0xff]
    %v78 = vld [vmem:[#allocation2 + $0x6c] sm:$0xf]
    %v79 = vld [vmem:[#allocation2 + $0x70] sm:$0xff]
    %v80 = vld [vmem:[#allocation2 + $0x78] sm:$0xff]
    %v81 = vld [vmem:[#allocation2 + $0x80] sm:$0xff]
    %v82 = vld [vmem:[#allocation2 + $0x88] sm:$0xf]
    %v83 = vld [vmem:[#allocation2 + $0x8c] sm:$0xff]
    %v84 = vld [vmem:[#allocation2 + $0x94] sm:$0xff]
    %v85 = vld [vmem:[#allocation2 + $0x9c] sm:$0xff]
    %v86 = vld [vmem:[#allocation2 + $0xa4] sm:$0xf]
    %v87 = vld [vmem:[#allocation2 + $0xa8] sm:$0xff]
    %v88 = vld [vmem:[#allocation2 + $0xb0] sm:$0xff]
    %v89 = vld [vmem:[#allocation2 + $0xb8] sm:$0xff]
    %v90 = vld [vmem:[#allocation2 + $0xc0] sm:$0xf]
    %v91 = vld [vmem:[#allocation2 + $0xc4] sm:$0xff]
    %v92 = vld [vmem:[#allocation2 + $0xcc] sm:$0xff]
    %v93 = vld [vmem:[#allocation2 + $0xd4] sm:$0xff]
    %v94 = vld [vmem:[#allocation2 + $0xdc] sm:$0xf]
    %v95 = vld [vmem:[#allocation5] sm:$0xf]
    %v96 = vld [vmem:[#allocation5 + $0x4] sm:$0xf]
    %v97 = vld [vmem:[#allocation5 + $0x8] sm:$0xf]
    %v98 = vld [vmem:[#allocation5 + $0xc] sm:$0xf]
    %v99 = vld [vmem:[#allocation5 + $0x10] sm:$0xf]
    %v100 = vld [vmem:[#allocation5 + $0x14] sm:$0xf]
    %v101 = vld [vmem:[#allocation5 + $0x18] sm:$0xf]
    %v102 = vld [vmem:[#allocation5 + $0x1c] sm:$0xf]
    %v103 = vld [vmem:[#allocation5 + $0x20] sm:$0xf]
    %v104 = vld [vmem:[#allocation5 + $0x24] sm:$0xf]
    %v105 = vld [vmem:[#allocation5 + $0x28] sm:$0xf]
    %v106 = vld [vmem:[#allocation5 + $0x2c] sm:$0xf]
    %v107 = vld [vmem:[#allocation5 + $0x30] sm:$0xf]
    %v108 = vld [vmem:[#allocation5 + $0x34] sm:$0xf]
    %v109 = vld [vmem:[#allocation5 + $0x38] sm:$0xf]
    %v110 = vld [vmem:[#allocation5 + $0x3c] sm:$0xf]
    %v111 = vld [vmem:[#allocation5 + $0x40] sm:$0xf]
    %v112 = vld [vmem:[#allocation5 + $0x44] sm:$0xf]
    %v113 = vld [vmem:[#allocation5 + $0x48] sm:$0xf]
    %v114 = vld [vmem:[#allocation5 + $0x4c] sm:$0xf]
    %v115 = vld [vmem:[#allocation5 + $0x50] sm:$0xf]
    %v116 = vld [vmem:[#allocation5 + $0x54] sm:$0xf]
    %v117 = vld [vmem:[#allocation5 + $0x58] sm:$0xf]
    %v118 = vld [vmem:[#allocation5 + $0x5c] sm:$0xf]
    %v119 = vld [vmem:[#allocation5 + $0x60] sm:$0xf]
    %v120 = vld [vmem:[#allocation5 + $0x64] sm:$0xf]
    %v121 = vld [vmem:[#allocation5 + $0x68] sm:$0xf]
    %v122 = vld [vmem:[#allocation5 + $0x6c] sm:$0xf]
    %v123 = vld [vmem:[#allocation5 + $0x70] sm:$0xf]
    %v124 = vld [vmem:[#allocation5 + $0x74] sm:$0xf]
    %v125 = vld [vmem:[#allocation5 + $0x78] sm:$0xf]
    %v126 = vld [vmem:[#allocation5 + $0x7c] sm:$0xf]
    %v127 = vld [vmem:[#allocation5 + $0x80] sm:$0xf]
    %v128 = vld [vmem:[#allocation5 + $0x84] sm:$0xf]
    %v129 = vld [vmem:[#allocation5 + $0x88] sm:$0xf]
    %v130 = vld [vmem:[#allocation5 + $0x8c] sm:$0xf]
    %v131 = vld [vmem:[#allocation5 + $0x90] sm:$0xf]
    %v132 = vld [vmem:[#allocation5 + $0x94] sm:$0xf]
    %v133 = vld [vmem:[#allocation5 + $0x98] sm:$0xf]
    %v134 = vld [vmem:[#allocation5 + $0x9c] sm:$0xf]
    %v135 = vld [vmem:[#allocation5 + $0xa0] sm:$0xf]
    %v136 = vld [vmem:[#allocation5 + $0xa4] sm:$0xf]
    %v137 = vld [vmem:[#allocation5 + $0xa8] sm:$0xf]
    %v138 = vld [vmem:[#allocation5 + $0xac] sm:$0xf]
    %v139 = vld [vmem:[#allocation5 + $0xb0] sm:$0xf]
    %v140 = vld [vmem:[#allocation5 + $0xb4] sm:$0xf]
    %v141 = vld [vmem:[#allocation5 + $0xb8] sm:$0xf]
    %v142 = vld [vmem:[#allocation5 + $0xbc] sm:$0xf]
    %v143 = vld [vmem:[#allocation5 + $0xc0] sm:$0xf]
    %v144 = vld [vmem:[#allocation5 + $0xc4] sm:$0xf]
    %v145 = vld [vmem:[#allocation5 + $0xc8] sm:$0xf]
    %v146 = vld [vmem:[#allocation5 + $0xcc] sm:$0xf]
    %v147 = vld [vmem:[#allocation5 + $0xd0] sm:$0xf]
    %v148 = vld [vmem:[#allocation5 + $0xd4] sm:$0xf]
    %v149 = vld [vmem:[#allocation5 + $0xd8] sm:$0xf]
    %v150 = vld [vmem:[#allocation5 + $0xdc] sm:$0xf]
    %v151 = vld [vmem:[#allocation5 + $0xe0] sm:$0xf]
    %v152 = vld [vmem:[#allocation5 + $0xe4] sm:$0xf]
    %v153 = vld [vmem:[#allocation5 + $0xe8] sm:$0xf]
    %v154 = vld [vmem:[#allocation5 + $0xec] sm:$0xf]
    %v155 = vld [vmem:[#allocation5 + $0xf0] sm:$0xf]
    %v156 = vld [vmem:[#allocation5 + $0xf4] sm:$0xf]
    %v157 = vld [vmem:[#allocation5 + $0xf8] sm:$0xf]
    %v158 = vld [vmem:[#allocation5 + $0xfc] sm:$0xf]
    %v159 = vld [vmem:[#allocation5 + $0x100] sm:$0xf]
    %v160 = vld [vmem:[#allocation5 + $0x104] sm:$0xf]
    %v161 = vld [vmem:[#allocation5 + $0x108] sm:$0xf]
    %v162 = vld [vmem:[#allocation5 + $0x10c] sm:$0xf]
    %v163 = vld [vmem:[#allocation5 + $0x110] sm:$0xf]
    %v164 = vld [vmem:[#allocation5 + $0x114] sm:$0xf]
    %v165 = vld [vmem:[#allocation5 + $0x118] sm:$0xf]
    %v166 = vld [vmem:[#allocation5 + $0x11c] sm:$0xf]
    %v167 = vld [vmem:[#allocation5 + $0x120] sm:$0xf]
    %v168 = vld [vmem:[#allocation5 + $0x124] sm:$0xf]
    %v169 = vld [vmem:[#allocation5 + $0x128] sm:$0xf]
    %v170 = vld [vmem:[#allocation5 + $0x12c] sm:$0xf]
    %v171 = vld [vmem:[#allocation5 + $0x130] sm:$0xf]
    %v172 = vld [vmem:[#allocation5 + $0x134] sm:$0xf]
    %v173 = vld [vmem:[#allocation5 + $0x138] sm:$0xf]
    %v174 = vld [vmem:[#allocation5 + $0x13c] sm:$0xf]
    %v175 = vld [vmem:[#allocation5 + $0x140] sm:$0xf]
    %v176 = vld [vmem:[#allocation5 + $0x144] sm:$0xf]
    %v177 = vld [vmem:[#allocation5 + $0x148] sm:$0xf]
    %v178 = vld [vmem:[#allocation5 + $0x14c] sm:$0xf]
    %v179 = vld [vmem:[#allocation5 + $0x150] sm:$0xf]
    %v180 = vld [vmem:[#allocation5 + $0x154] sm:$0xf]
    %v181 = vld [vmem:[#allocation5 + $0x158] sm:$0xf]
    %v182 = vld [vmem:[#allocation5 + $0x15c] sm:$0xf]
    %v183 = vld [vmem:[#allocation5 + $0x160] sm:$0xf]
    %v184 = vld [vmem:[#allocation5 + $0x164] sm:$0xf]
    %v185 = vld [vmem:[#allocation5 + $0x168] sm:$0xf]
    %v186 = vld [vmem:[#allocation5 + $0x16c] sm:$0xf]
    %v187 = vld [vmem:[#allocation5 + $0x170] sm:$0xf]
    %v188 = vld [vmem:[#allocation5 + $0x174] sm:$0xf]
    %v189 = vld [vmem:[#allocation5 + $0x178] sm:$0xf]
    %v190 = vld [vmem:[#allocation5 + $0x17c] sm:$0xf]
    %v191 = vld [vmem:[#allocation5 + $0x180] sm:$0xf]
    %v192 = vld [vmem:[#allocation5 + $0x184] sm:$0xf]
    %v193 = vld [vmem:[%s2] sm:$0x1]
    %v195 = vlaneseq
    %v196 = vshrl.u32 %v195, 7
    %v197 = vsub.s32 0, %v196
    %v198 = vrot.slane %v193, %v197
    %v232 = vunpack.c.l.b16 %v63
    %v233 = vunpack.c.h.b16 %v63
    %v234 = vunpack.c.l.b16 %v64
    %v235 = vunpack.c.h.b16 %v64
    %v236 = vunpack.c.l.b16 %v65
    %v237 = vunpack.c.h.b16 %v65
    %v238 = vunpack.c.l.b16 %v66
    %v239 = vunpack.c.l.b16 %v67
    %v240 = vunpack.c.h.b16 %v67
    %v241 = vunpack.c.l.b16 %v68
    %v242 = vunpack.c.h.b16 %v68
    %v243 = vunpack.c.l.b16 %v69
    %v244 = vunpack.c.h.b16 %v69
    %v245 = vunpack.c.l.b16 %v70
    %v246 = vunpack.c.l.b16 %v71
    %v247 = vunpack.c.h.b16 %v71
    %v248 = vunpack.c.l.b16 %v72
    %v249 = vunpack.c.h.b16 %v72
    %v250 = vunpack.c.l.b16 %v73
    %v251 = vunpack.c.h.b16 %v73
    %v252 = vunpack.c.l.b16 %v74
    %v253 = vunpack.c.l.b16 %v75
    %v254 = vunpack.c.h.b16 %v75
    %v255 = vunpack.c.l.b16 %v76
    %v256 = vunpack.c.h.b16 %v76
    %v257 = vunpack.c.l.b16 %v77
    %v258 = vunpack.c.h.b16 %v77
    %v259 = vunpack.c.l.b16 %v78
    %v260 = vunpack.c.l.b16 %v79
    %v261 = vunpack.c.h.b16 %v79
    %v262 = vunpack.c.l.b16 %v80
    %v263 = vunpack.c.h.b16 %v80
    %v264 = vunpack.c.l.b16 %v81
    %v265 = vunpack.c.h.b16 %v81
    %v266 = vunpack.c.l.b16 %v82
    %v267 = vunpack.c.l.b16 %v83
    %v268 = vunpack.c.h.b16 %v83
    %v269 = vunpack.c.l.b16 %v84
    %v270 = vunpack.c.h.b16 %v84
    %v271 = vunpack.c.l.b16 %v85
    %v272 = vunpack.c.h.b16 %v85
    %v273 = vunpack.c.l.b16 %v86
    %v274 = vunpack.c.l.b16 %v87
    %v275 = vunpack.c.h.b16 %v87
    %v276 = vunpack.c.l.b16 %v88
    %v277 = vunpack.c.h.b16 %v88
    %v278 = vunpack.c.l.b16 %v89
    %v279 = vunpack.c.h.b16 %v89
    %v280 = vunpack.c.l.b16 %v90
    %v281 = vunpack.c.l.b16 %v91
    %v282 = vunpack.c.h.b16 %v91
    %v283 = vunpack.c.l.b16 %v92
    %v284 = vunpack.c.h.b16 %v92
    %v285 = vunpack.c.l.b16 %v93
    %v286 = vunpack.c.h.b16 %v93
    %v287 = vunpack.c.l.b16 %v94
    %v288 = vpack.c.b16 %v239, %v232
    %v289 = vpack.c.b16 %v240, %v233
    %v290 = vpack.c.b16 %v241, %v234
    %v291 = vpack.c.b16 %v242, %v235
    %v292 = vpack.c.b16 %v243, %v236
    %v293 = vpack.c.b16 %v244, %v237
    %v294 = vpack.c.b16 %v245, %v238
    %v295 = vpack.c.b16 %v253, %v246
    %v296 = vpack.c.b16 %v254, %v247
    %v297 = vpack.c.b16 %v255, %v248
    %v298 = vpack.c.b16 %v256, %v249
    %v299 = vpack.c.b16 %v257, %v250
    %v300 = vpack.c.b16 %v258, %v251
    %v301 = vpack.c.b16 %v259, %v252
    %v302 = vpack.c.b16 %v267, %v260
    %v303 = vpack.c.b16 %v268, %v261
    %v304 = vpack.c.b16 %v269, %v262
    %v305 = vpack.c.b16 %v270, %v263
    %v306 = vpack.c.b16 %v271, %v264
    %v307 = vpack.c.b16 %v272, %v265
    %v308 = vpack.c.b16 %v273, %v266
    %v309 = vpack.c.b16 %v281, %v274
    %v310 = vpack.c.b16 %v282, %v275
    %v311 = vpack.c.b16 %v283, %v276
    %v312 = vpack.c.b16 %v284, %v277
    %v313 = vpack.c.b16 %v285, %v278
    %v314 = vpack.c.b16 %v286, %v279
    %v315 = vpack.c.b16 %v287, %v280
    %v438 = vunpack.c.l.b16 %v95
    %v439 = vunpack.c.l.b16 %v96
    %v440 = vunpack.c.l.b16 %v97
    %v441 = vunpack.c.l.b16 %v98
    %v442 = vunpack.c.l.b16 %v99
    %v443 = vunpack.c.l.b16 %v100
    %v444 = vunpack.c.l.b16 %v101
    %v445 = vunpack.c.l.b16 %v102
    %v446 = vunpack.c.l.b16 %v103
    %v447 = vunpack.c.l.b16 %v104
    %v448 = vunpack.c.l.b16 %v105
    %v449 = vunpack.c.l.b16 %v106
    %v450 = vunpack.c.l.b16 %v107
    %v451 = vunpack.c.l.b16 %v108
    %v452 = vunpack.c.l.b16 %v109
    %v453 = vunpack.c.l.b16 %v110
    %v454 = vunpack.c.l.b16 %v111
    %v455 = vunpack.c.l.b16 %v112
    %v456 = vunpack.c.l.b16 %v113
    %v457 = vunpack.c.l.b16 %v114
    %v458 = vunpack.c.l.b16 %v115
    %v459 = vunpack.c.l.b16 %v116
    %v460 = vunpack.c.l.b16 %v117
    %v461 = vunpack.c.l.b16 %v118
    %v462 = vunpack.c.l.b16 %v119
    %v463 = vunpack.c.l.b16 %v120
    %v464 = vunpack.c.l.b16 %v121
    %v465 = vunpack.c.l.b16 %v122
    %v466 = vunpack.c.l.b16 %v123
    %v467 = vunpack.c.l.b16 %v124
    %v468 = vunpack.c.l.b16 %v125
    %v469 = vunpack.c.l.b16 %v126
    %v470 = vunpack.c.l.b16 %v127
    %v471 = vunpack.c.l.b16 %v128
    %v472 = vunpack.c.l.b16 %v129
    %v473 = vunpack.c.l.b16 %v130
    %v474 = vunpack.c.l.b16 %v131
    %v475 = vunpack.c.l.b16 %v132
    %v476 = vunpack.c.l.b16 %v133
    %v477 = vunpack.c.l.b16 %v134
    %v478 = vunpack.c.l.b16 %v135
    %v479 = vunpack.c.l.b16 %v136
    %v480 = vunpack.c.l.b16 %v137
    %v481 = vunpack.c.l.b16 %v138
    %v482 = vunpack.c.l.b16 %v139
    %v483 = vunpack.c.l.b16 %v140
    %v484 = vunpack.c.l.b16 %v141
    %v485 = vunpack.c.l.b16 %v142
    %v486 = vunpack.c.l.b16 %v143
    %v487 = vunpack.c.l.b16 %v144
    %v488 = vunpack.c.l.b16 %v145
    %v489 = vunpack.c.l.b16 %v146
    %v490 = vunpack.c.l.b16 %v147
    %v491 = vunpack.c.l.b16 %v148
    %v492 = vunpack.c.l.b16 %v149
    %v493 = vunpack.c.l.b16 %v150
    %v494 = vunpack.c.l.b16 %v151
    %v495 = vunpack.c.l.b16 %v152
    %v496 = vunpack.c.l.b16 %v153
    %v497 = vunpack.c.l.b16 %v154
    %v498 = vunpack.c.l.b16 %v155
    %v499 = vunpack.c.l.b16 %v156
    %v500 = vunpack.c.l.b16 %v157
    %v501 = vunpack.c.l.b16 %v158
    %v502 = vunpack.c.l.b16 %v159
    %v503 = vunpack.c.l.b16 %v160
    %v504 = vunpack.c.l.b16 %v161
    %v505 = vunpack.c.l.b16 %v162
    %v506 = vunpack.c.l.b16 %v163
    %v507 = vunpack.c.l.b16 %v164
    %v508 = vunpack.c.l.b16 %v165
    %v509 = vunpack.c.l.b16 %v166
    %v510 = vunpack.c.l.b16 %v167
    %v511 = vunpack.c.l.b16 %v168
    %v512 = vunpack.c.l.b16 %v169
    %v513 = vunpack.c.l.b16 %v170
    %v514 = vunpack.c.l.b16 %v171
    %v515 = vunpack.c.l.b16 %v172
    %v516 = vunpack.c.l.b16 %v173
    %v517 = vunpack.c.l.b16 %v174
    %v518 = vunpack.c.l.b16 %v175
    %v519 = vunpack.c.l.b16 %v176
    %v520 = vunpack.c.l.b16 %v177
    %v521 = vunpack.c.l.b16 %v178
    %v522 = vunpack.c.l.b16 %v179
    %v523 = vunpack.c.l.b16 %v180
    %v524 = vunpack.c.l.b16 %v181
    %v525 = vunpack.c.l.b16 %v182
    %v526 = vunpack.c.l.b16 %v183
    %v527 = vunpack.c.l.b16 %v184
    %v528 = vunpack.c.l.b16 %v185
    %v529 = vunpack.c.l.b16 %v186
    %v530 = vunpack.c.l.b16 %v187
    %v531 = vunpack.c.l.b16 %v188
    %v532 = vunpack.c.l.b16 %v189
    %v533 = vunpack.c.l.b16 %v190
    %v534 = vunpack.c.l.b16 %v191
    %v535 = vunpack.c.l.b16 %v192
    %v536 = vpack.c.b16 %v439, %v438
    %v537 = vpack.c.b16 %v441, %v440
    %v538 = vpack.c.b16 %v443, %v442
    %v539 = vpack.c.b16 %v445, %v444
    %v540 = vpack.c.b16 %v447, %v446
    %v541 = vpack.c.b16 %v449, %v448
    %v542 = vpack.c.b16 %v451, %v450
    %v543 = vpack.c.b16 %v453, %v452
    %v544 = vpack.c.b16 %v455, %v454
    %v545 = vpack.c.b16 %v457, %v456
    %v546 = vpack.c.b16 %v459, %v458
    %v547 = vpack.c.b16 %v461, %v460
    %v548 = vpack.c.b16 %v463, %v462
    %v549 = vpack.c.b16 %v465, %v464
    %v550 = vpack.c.b16 %v467, %v466
    %v551 = vpack.c.b16 %v469, %v468
    %v552 = vpack.c.b16 %v471, %v470
    %v553 = vpack.c.b16 %v473, %v472
    %v554 = vpack.c.b16 %v475, %v474
    %v555 = vpack.c.b16 %v477, %v476
    %v556 = vpack.c.b16 %v479, %v478
    %v557 = vpack.c.b16 %v481, %v480
    %v558 = vpack.c.b16 %v483, %v482
    %v559 = vpack.c.b16 %v485, %v484
    %v560 = vpack.c.b16 %v487, %v486
    %v561 = vpack.c.b16 %v489, %v488
    %v562 = vpack.c.b16 %v491, %v490
    %v563 = vpack.c.b16 %v493, %v492
    %v564 = vpack.c.b16 %v495, %v494
    %v565 = vpack.c.b16 %v497, %v496
    %v566 = vpack.c.b16 %v499, %v498
    %v567 = vpack.c.b16 %v501, %v500
    %v568 = vpack.c.b16 %v503, %v502
    %v569 = vpack.c.b16 %v505, %v504
    %v570 = vpack.c.b16 %v507, %v506
    %v571 = vpack.c.b16 %v509, %v508
    %v572 = vpack.c.b16 %v511, %v510
    %v573 = vpack.c.b16 %v513, %v512
    %v574 = vpack.c.b16 %v515, %v514
    %v575 = vpack.c.b16 %v517, %v516
    %v576 = vpack.c.b16 %v519, %v518
    %v577 = vpack.c.b16 %v521, %v520
    %v578 = vpack.c.b16 %v523, %v522
    %v579 = vpack.c.b16 %v525, %v524
    %v580 = vpack.c.b16 %v527, %v526
    %v581 = vpack.c.b16 %v529, %v528
    %v582 = vpack.c.b16 %v531, %v530
    %v583 = vpack.c.b16 %v533, %v532
    %v584 = vpack.c.b16 %v535, %v534
    %vm634 = vcmask 130048
    %v636 = vsel %vm634, %v294, 0
    %v639 = vsel %vm634, %v301, 0
    %v642 = vsel %vm634, %v308, 0
    %v645 = vsel %vm634, %v315, 0
    %647 = vmatprep.subr.bf16.mxu0 0
    %648 = vmatpush1.bf16.msra.mxu0 %v536
    %649 = vmatprep.subr.bf16.mxu0 0
    %650 = vmatpush1.bf16.msra.mxu0 %v537
    %651 = vmatprep.subr.bf16.mxu0 0
    %652 = vmatpush1.bf16.msra.mxu0 %v538
    %653 = vmatprep.subr.bf16.mxu0 0
    %654 = vmatpush1.bf16.msra.mxu0 %v539
    %655 = vmatprep.subr.bf16.mxu0 0
    %656 = vmatpush1.bf16.msra.mxu0 %v540
    %657 = vmatprep.subr.bf16.mxu0 0
    %658 = vmatpush1.bf16.msra.mxu0 %v541
    %659 = vmatprep.subr.bf16.mxu0 0
    %660 = vmatpush1.bf16.msra.mxu0 %v542
    %661 = vmatprep.subr.bf16.mxu0 0
    %662 = vmatpush1.bf16.msra.mxu0 %v543
    %663 = vmatprep.subr.bf16.mxu0 0
    %664 = vmatpush1.bf16.msra.mxu0 %v544
    %665 = vmatprep.subr.bf16.mxu0 0
    %666 = vmatpush1.bf16.msra.mxu0 %v545
    %667 = vmatprep.subr.bf16.mxu0 0
    %668 = vmatpush1.bf16.msra.mxu0 %v546
    %669 = vmatprep.subr.bf16.mxu0 0
    %670 = vmatpush1.bf16.msra.mxu0 %v547
    %671 = vmatprep.subr.bf16.mxu0 0
    %672 = vmatpush1.bf16.msra.mxu0 %v548
    %673 = vmatprep.subr.bf16.mxu0 0
    %674 = vmatpush1.bf16.msra.mxu0 %v549
    %675 = vmatprep.subr.bf16.mxu0 0
    %676 = vmatpush1.bf16.msra.mxu0 %v550
    %677 = vmatprep.subr.bf16.mxu0 0
    %678 = vmatpush1.bf16.msra.mxu0 %v551
    %679 = vmatprep.mubr.bf16.mxu0 %v289
    %680 = vmatmul.mubr.bf16.gmra.mrb[0].mxu0 %v288
    %v681 = vpop.f32.mrb[0].mxu0
    %v682 = vadd.f32 %v198, %v681
    %v683 = vpop.f32.mrb[0].mxu0
    %v684 = vpop.f32.mrb[0].mxu0
    %v685 = vadd.f32 %v198, %v684
    %v686 = vpop.f32.mrb[0].mxu0
    %687 = vmatprep.mubr.bf16.mxu0 %v296
    %688 = vmatmul.mubr.bf16.gmra.mrb[0].mxu0 %v295
    %v689 = vpop.f32.mrb[0].mxu0
    %v690 = vadd.f32 %v198, %v689
    %v691 = vpop.f32.mrb[0].mxu0
    %v692 = vpop.f32.mrb[0].mxu0
    %v693 = vadd.f32 %v198, %v692
    %v694 = vpop.f32.mrb[0].mxu0
    %695 = vmatprep.mubr.bf16.mxu0 %v303
    %696 = vmatmul.mubr.bf16.gmra.mrb[0].mxu0 %v302
    %v697 = vpop.f32.mrb[0].mxu0
    %v698 = vadd.f32 %v198, %v697
    %v699 = vpop.f32.mrb[0].mxu0
    %v700 = vpop.f32.mrb[0].mxu0
    %v701 = vadd.f32 %v198, %v700
    %v702 = vpop.f32.mrb[0].mxu0
    %703 = vmatprep.mubr.bf16.mxu0 %v310
    %704 = vmatmul.mubr.bf16.gmra.mrb[0].mxu0 %v309
    %v705 = vpop.f32.mrb[0].mxu0
    %v706 = vadd.f32 %v198, %v705
    %v707 = vpop.f32.mrb[0].mxu0
    %v708 = vpop.f32.mrb[0].mxu0
    %v709 = vadd.f32 %v198, %v708
    %v710 = vpop.f32.mrb[0].mxu0
    %711 = vdwg.mxu0
    %712 = vmatprep.subr.bf16.mxu0 0
    %713 = vmatpush1.bf16.msra.mxu0 %v552
    %714 = vmatprep.subr.bf16.mxu0 0
    %715 = vmatpush1.bf16.msra.mxu0 %v553
    %716 = vmatprep.subr.bf16.mxu0 0
    %717 = vmatpush1.bf16.msra.mxu0 %v554
    %718 = vmatprep.subr.bf16.mxu0 0
    %719 = vmatpush1.bf16.msra.mxu0 %v555
    %720 = vmatprep.subr.bf16.mxu0 0
    %721 = vmatpush1.bf16.msra.mxu0 %v556
    %722 = vmatprep.subr.bf16.mxu0 0
    %723 = vmatpush1.bf16.msra.mxu0 %v557
    %724 = vmatprep.subr.bf16.mxu0 0
    %725 = vmatpush1.bf16.msra.mxu0 %v558
    %726 = vmatprep.subr.bf16.mxu0 0
    %727 = vmatpush1.bf16.msra.mxu0 %v559
    %728 = vmatprep.subr.bf16.mxu0 0
    %729 = vmatpush1.bf16.msra.mxu0 %v560
    %730 = vmatprep.subr.bf16.mxu0 0
    %731 = vmatpush1.bf16.msra.mxu0 %v561
    %732 = vmatprep.subr.bf16.mxu0 0
    %733 = vmatpush1.bf16.msra.mxu0 %v562
    %734 = vmatprep.subr.bf16.mxu0 0
    %735 = vmatpush1.bf16.msra.mxu0 %v563
    %736 = vmatprep.subr.bf16.mxu0 0
    %737 = vmatpush1.bf16.msra.mxu0 %v564
    %738 = vmatprep.subr.bf16.mxu0 0
    %739 = vmatpush1.bf16.msra.mxu0 %v565
    %740 = vmatprep.subr.bf16.mxu0 0
    %741 = vmatpush1.bf16.msra.mxu0 %v566
    %742 = vmatprep.subr.bf16.mxu0 0
    %743 = vmatpush1.bf16.msra.mxu0 %v567
    %744 = vmatprep.mubr.bf16.mxu0 %v291
    %745 = vmatmul.mubr.bf16.gmra.mrb[0].mxu0 %v290
    %v746 = vpop.f32.mrb[0].mxu0
    %v747 = vadd.f32 %v682, %v746
    %v748 = vpop.f32.mrb[0].mxu0
    %v749 = vpop.f32.mrb[0].mxu0
    %v750 = vadd.f32 %v685, %v749
    %v751 = vpop.f32.mrb[0].mxu0
    %752 = vmatprep.mubr.bf16.mxu0 %v298
    %753 = vmatmul.mubr.bf16.gmra.mrb[0].mxu0 %v297
    %v754 = vpop.f32.mrb[0].mxu0
    %v755 = vadd.f32 %v690, %v754
    %v756 = vpop.f32.mrb[0].mxu0
    %v757 = vpop.f32.mrb[0].mxu0
    %v758 = vadd.f32 %v693, %v757
    %v759 = vpop.f32.mrb[0].mxu0
    %760 = vmatprep.mubr.bf16.mxu0 %v305
    %761 = vmatmul.mubr.bf16.gmra.mrb[0].mxu0 %v304
    %v762 = vpop.f32.mrb[0].mxu0
    %v763 = vadd.f32 %v698, %v762
    %v764 = vpop.f32.mrb[0].mxu0
    %v765 = vpop.f32.mrb[0].mxu0
    %v766 = vadd.f32 %v701, %v765
    %v767 = vpop.f32.mrb[0].mxu0
    %768 = vmatprep.mubr.bf16.mxu0 %v312
    %769 = vmatmul.mubr.bf16.gmra.mrb[0].mxu0 %v311
    %v770 = vpop.f32.mrb[0].mxu0
    %v771 = vadd.f32 %v706, %v770
    %v772 = vpop.f32.mrb[0].mxu0
    %v773 = vpop.f32.mrb[0].mxu0
    %v774 = vadd.f32 %v709, %v773
    %v775 = vpop.f32.mrb[0].mxu0
    %776 = vdwg.mxu0
    %777 = vmatprep.subr.bf16.mxu0 0
    %778 = vmatpush1.bf16.msra.mxu0 %v568
    %779 = vmatprep.subr.bf16.mxu0 0
    %780 = vmatpush1.bf16.msra.mxu0 %v569
    %781 = vmatprep.subr.bf16.mxu0 0
    %782 = vmatpush1.bf16.msra.mxu0 %v570
    %783 = vmatprep.subr.bf16.mxu0 0
    %784 = vmatpush1.bf16.msra.mxu0 %v571
    %785 = vmatprep.subr.bf16.mxu0 0
    %786 = vmatpush1.bf16.msra.mxu0 %v572
    %787 = vmatprep.subr.bf16.mxu0 0
    %788 = vmatpush1.bf16.msra.mxu0 %v573
    %789 = vmatprep.subr.bf16.mxu0 0
    %790 = vmatpush1.bf16.msra.mxu0 %v574
    %791 = vmatprep.subr.bf16.mxu0 0
    %792 = vmatpush1.bf16.msra.mxu0 %v575
    %793 = vmatprep.subr.bf16.mxu0 0
    %794 = vmatpush1.bf16.msra.mxu0 %v576
    %795 = vmatprep.subr.bf16.mxu0 0
    %796 = vmatpush1.bf16.msra.mxu0 %v577
    %797 = vmatprep.subr.bf16.mxu0 0
    %798 = vmatpush1.bf16.msra.mxu0 %v578
    %799 = vmatprep.subr.bf16.mxu0 0
    %800 = vmatpush1.bf16.msra.mxu0 %v579
    %801 = vmatprep.subr.bf16.mxu0 0
    %802 = vmatpush1.bf16.msra.mxu0 %v580
    %803 = vmatprep.subr.bf16.mxu0 0
    %804 = vmatpush1.bf16.msra.mxu0 %v581
    %805 = vmatprep.subr.bf16.mxu0 0
    %806 = vmatpush1.bf16.msra.mxu0 %v582
    %807 = vmatprep.subr.bf16.mxu0 0
    %808 = vmatpush1.bf16.msra.mxu0 %v583
    %809 = vmatprep.mubr.bf16.mxu0 %v293
    %810 = vmatmul.mubr.bf16.gmra.mrb[0].mxu0 %v292
    %v811 = vpop.f32.mrb[0].mxu0
    %v812 = vadd.f32 %v747, %v811
    %v813 = vpop.f32.mrb[0].mxu0
    %v814 = vpop.f32.mrb[0].mxu0
    %v815 = vadd.f32 %v750, %v814
    %v816 = vpop.f32.mrb[0].mxu0
    %817 = vmatprep.mubr.bf16.mxu0 %v300
    %818 = vmatmul.mubr.bf16.gmra.mrb[0].mxu0 %v299
    %v819 = vpop.f32.mrb[0].mxu0
    %v820 = vadd.f32 %v755, %v819
    %v821 = vpop.f32.mrb[0].mxu0
    %v822 = vpop.f32.mrb[0].mxu0
    %v823 = vadd.f32 %v758, %v822
    %v824 = vpop.f32.mrb[0].mxu0
    %825 = vmatprep.mubr.bf16.mxu0 %v307
    %826 = vmatmul.mubr.bf16.gmra.mrb[0].mxu0 %v306
    %v827 = vpop.f32.mrb[0].mxu0
    %v828 = vadd.f32 %v763, %v827
    %v829 = vpop.f32.mrb[0].mxu0
    %v830 = vpop.f32.mrb[0].mxu0
    %v831 = vadd.f32 %v766, %v830
    %v832 = vpop.f32.mrb[0].mxu0
    %833 = vmatprep.mubr.bf16.mxu0 %v314
    %834 = vmatmul.mubr.bf16.gmra.mrb[0].mxu0 %v313
    %v835 = vpop.f32.mrb[0].mxu0
    %v836 = vadd.f32 %v771, %v835
    %v837 = vpop.f32.mrb[0].mxu0
    %v838 = vpop.f32.mrb[0].mxu0
    %v839 = vadd.f32 %v774, %v838
    %v840 = vpop.f32.mrb[0].mxu0
    %841 = vdwg.mxu0
    %842 = vmatprep.subr.bf16.mxu0 0
    %843 = vmatpush1.bf16.msra.mxu0 %v584
    %844 = vmatprep.subr.bf16.mxu0 0
    %845 = vmatpush1.bf16.msra.mxu0 0
    %846 = vmatprep.subr.bf16.mxu0 0
    %847 = vmatpush1.bf16.msra.mxu0 0
    %848 = vmatprep.subr.bf16.mxu0 0
    %849 = vmatpush1.bf16.msra.mxu0 0
    %850 = vmatprep.subr.bf16.mxu0 0
    %851 = vmatpush1.bf16.msra.mxu0 0
    %852 = vmatprep.subr.bf16.mxu0 0
    %853 = vmatpush1.bf16.msra.mxu0 0
    %854 = vmatprep.subr.bf16.mxu0 0
    %855 = vmatpush1.bf16.msra.mxu0 0
    %856 = vmatprep.subr.bf16.mxu0 0
    %857 = vmatpush1.bf16.msra.mxu0 0
    %858 = vmatprep.subr.bf16.mxu0 0
    %859 = vmatpush1.bf16.msra.mxu0 0
    %860 = vmatprep.subr.bf16.mxu0 0
    %861 = vmatpush1.bf16.msra.mxu0 0
    %862 = vmatprep.subr.bf16.mxu0 0
    %863 = vmatpush1.bf16.msra.mxu0 0
    %864 = vmatprep.subr.bf16.mxu0 0
    %865 = vmatpush1.bf16.msra.mxu0 0
    %866 = vmatprep.subr.bf16.mxu0 0
    %867 = vmatpush1.bf16.msra.mxu0 0
    %868 = vmatprep.subr.bf16.mxu0 0
    %869 = vmatpush1.bf16.msra.mxu0 0
    %870 = vmatprep.subr.bf16.mxu0 0
    %871 = vmatpush1.bf16.msra.mxu0 0
    %872 = vmatprep.subr.bf16.mxu0 0
    %873 = vmatpush1.bf16.msra.mxu0 0
    %874 = vmatprep.mubr.bf16.mxu0 0
    %875 = vmatmul.mubr.bf16.gmra.mrb[0].mxu0 %v636
    %v876 = vpop.f32.mrb[0].mxu0
    %v877 = vadd.f32 %v812, %v876
    %v878 = vpop.f32.mrb[0].mxu0
    %v879 = vpop.f32.mrb[0].mxu0
    %v880 = vadd.f32 %v815, %v879
    %v881 = vpop.f32.mrb[0].mxu0
    %882 = vmatprep.mubr.bf16.mxu0 0
    %883 = vmatmul.mubr.bf16.gmra.mrb[0].mxu0 %v639
    %v884 = vpop.f32.mrb[0].mxu0
    %v885 = vadd.f32 %v820, %v884
    %v886 = vpop.f32.mrb[0].mxu0
    %v887 = vpop.f32.mrb[0].mxu0
    %v888 = vadd.f32 %v823, %v887
    %v889 = vpop.f32.mrb[0].mxu0
    %890 = vmatprep.mubr.bf16.mxu0 0
    %891 = vmatmul.mubr.bf16.gmra.mrb[0].mxu0 %v642
    %v892 = vpop.f32.mrb[0].mxu0
    %v893 = vadd.f32 %v828, %v892
    %v894 = vpop.f32.mrb[0].mxu0
    %v895 = vpop.f32.mrb[0].mxu0
    %v896 = vadd.f32 %v831, %v895
    %v897 = vpop.f32.mrb[0].mxu0
    %898 = vmatprep.mubr.bf16.mxu0 0
    %899 = vmatmul.mubr.bf16.gmra.mrb[0].mxu0 %v645
    %v900 = vpop.f32.mrb[0].mxu0
    %v901 = vadd.f32 %v836, %v900
    %v902 = vpop.f32.mrb[0].mxu0
    %v903 = vpop.f32.mrb[0].mxu0
    %v904 = vadd.f32 %v839, %v903
    %v905 = vpop.f32.mrb[0].mxu0
    %906 = vdwg.mxu0
    %v907 = vmax.f32 %v877, 0.0
    %v908 = vmax.f32 %v880, 0.0
    %v909 = vmax.f32 %v885, 0.0
    %v910 = vmax.f32 %v888, 0.0
    %v911 = vmax.f32 %v893, 0.0
    %v912 = vmax.f32 %v896, 0.0
    %v913 = vmax.f32 %v901, 0.0
    %v914 = vmax.f32 %v904, 0.0
    %v915 = vpack.c.bf16 %v908, %v907
    %v916 = vpack.c.bf16 %v910, %v909
    %v917 = vpack.c.bf16 %v912, %v911
    %v918 = vpack.c.bf16 %v914, %v913
    %v919 = vld [vmem:[#allocation7] sm:$0xf]
    %v920 = vld [vmem:[#allocation7 + $0x4] sm:$0xf]
    %v921 = vld [vmem:[#allocation7 + $0x8] sm:$0xf]
    %v922 = vld [vmem:[#allocation7 + $0xc] sm:$0xf]
    %v923 = vld [vmem:[#allocation7 + $0x10] sm:$0xf]
    %v924 = vld [vmem:[#allocation7 + $0x14] sm:$0xf]
    %v925 = vld [vmem:[#allocation7 + $0x18] sm:$0xf]
    %v926 = vld [vmem:[#allocation7 + $0x1c] sm:$0xf]
    %v927 = vld [vmem:[#allocation7 + $0x20] sm:$0xf]
    %v928 = vld [vmem:[#allocation7 + $0x24] sm:$0xf]
    %v929 = vld [vmem:[#allocation7 + $0x28] sm:$0xf]
    %v930 = vld [vmem:[#allocation7 + $0x2c] sm:$0xf]
    %v931 = vld [vmem:[#allocation7 + $0x30] sm:$0xf]
    %v932 = vld [vmem:[#allocation7 + $0x34] sm:$0xf]
    %v933 = vld [vmem:[#allocation7 + $0x38] sm:$0xf]
    %v934 = vld [vmem:[#allocation7 + $0x3c] sm:$0xf]
    %v935 = vld [vmem:[%s4] sm:$0x1]
    %v937 = vlaneseq
    %v938 = vshrl.u32 %v937, 7
    %v939 = vsub.s32 0, %v938
    %v940 = vrot.slane %v935, %v939
    %v958 = vunpack.c.l.b16 %v919
    %v959 = vunpack.c.l.b16 %v920
    %v960 = vunpack.c.l.b16 %v921
    %v961 = vunpack.c.l.b16 %v922
    %v962 = vunpack.c.l.b16 %v923
    %v963 = vunpack.c.l.b16 %v924
    %v964 = vunpack.c.l.b16 %v925
    %v965 = vunpack.c.l.b16 %v926
    %v966 = vunpack.c.l.b16 %v927
    %v967 = vunpack.c.l.b16 %v928
    %v968 = vunpack.c.l.b16 %v929
    %v969 = vunpack.c.l.b16 %v930
    %v970 = vunpack.c.l.b16 %v931
    %v971 = vunpack.c.l.b16 %v932
    %v972 = vunpack.c.l.b16 %v933
    %v973 = vunpack.c.l.b16 %v934
    %v974 = vpack.c.b16 %v959, %v958
    %v975 = vpack.c.b16 %v961, %v960
    %v976 = vpack.c.b16 %v963, %v962
    %v977 = vpack.c.b16 %v965, %v964
    %v978 = vpack.c.b16 %v967, %v966
    %v979 = vpack.c.b16 %v969, %v968
    %v980 = vpack.c.b16 %v971, %v970
    %v981 = vpack.c.b16 %v973, %v972
    %990 = vmatprep.subr.bf16.mxu0 0
    %991 = vmatpush1.bf16.msra.mxu0 %v974
    %992 = vmatprep.subr.bf16.mxu0 0
    %993 = vmatpush1.bf16.msra.mxu0 %v975
    %994 = vmatprep.subr.bf16.mxu0 0
    %995 = vmatpush1.bf16.msra.mxu0 %v976
    %996 = vmatprep.subr.bf16.mxu0 0
    %997 = vmatpush1.bf16.msra.mxu0 %v977
    %998 = vmatprep.subr.bf16.mxu0 0
    %999 = vmatpush1.bf16.msra.mxu0 %v978
    %1000 = vmatprep.subr.bf16.mxu0 0
    %1001 = vmatpush1.bf16.msra.mxu0 %v979
    %1002 = vmatprep.subr.bf16.mxu0 0
    %1003 = vmatpush1.bf16.msra.mxu0 %v980
    %1004 = vmatprep.subr.bf16.mxu0 0
    %1005 = vmatpush1.bf16.msra.mxu0 %v981
    %1006 = vmatprep.subr.bf16.mxu0 0
    %1007 = vmatpush1.bf16.msra.mxu0 0
    %1008 = vmatprep.subr.bf16.mxu0 0
    %1009 = vmatpush1.bf16.msra.mxu0 0
    %1010 = vmatprep.subr.bf16.mxu0 0
    %1011 = vmatpush1.bf16.msra.mxu0 0
    %1012 = vmatprep.subr.bf16.mxu0 0
    %1013 = vmatpush1.bf16.msra.mxu0 0
    %1014 = vmatprep.subr.bf16.mxu0 0
    %1015 = vmatpush1.bf16.msra.mxu0 0
    %1016 = vmatprep.subr.bf16.mxu0 0
    %1017 = vmatpush1.bf16.msra.mxu0 0
    %1018 = vmatprep.subr.bf16.mxu0 0
    %1019 = vmatpush1.bf16.msra.mxu0 0
    %1020 = vmatprep.subr.bf16.mxu0 0
    %1021 = vmatpush1.bf16.msra.mxu0 0
    %1022 = vmatprep.mubr.bf16.mxu0 0
    %1023 = vmatmul.mubr.bf16.gmra.mrb[0].mxu0 %v915
    %v1024 = vpop.f32.mrb[0].mxu0
    %v1025 = vadd.f32 %v940, %v1024
    %v1026 = vpop.f32.mrb[0].mxu0
    %v1027 = vpop.f32.mrb[0].mxu0
    %v1028 = vadd.f32 %v940, %v1027
    %v1029 = vpop.f32.mrb[0].mxu0
    %1030 = vmatprep.mubr.bf16.mxu0 0
    %1031 = vmatmul.mubr.bf16.gmra.mrb[0].mxu0 %v916
    %v1032 = vpop.f32.mrb[0].mxu0
    %v1033 = vadd.f32 %v940, %v1032
    %v1034 = vpop.f32.mrb[0].mxu0
    %v1035 = vpop.f32.mrb[0].mxu0
    %v1036 = vadd.f32 %v940, %v1035
    %v1037 = vpop.f32.mrb[0].mxu0
    %1038 = vmatprep.mubr.bf16.mxu0 0
    %1039 = vmatmul.mubr.bf16.gmra.mrb[0].mxu0 %v917
    %v1040 = vpop.f32.mrb[0].mxu0
    %v1041 = vadd.f32 %v940, %v1040
    %v1042 = vpop.f32.mrb[0].mxu0
    %v1043 = vpop.f32.mrb[0].mxu0
    %v1044 = vadd.f32 %v940, %v1043
    %v1045 = vpop.f32.mrb[0].mxu0
    %1046 = vmatprep.mubr.bf16.mxu0 0
    %1047 = vmatmul.mubr.bf16.gmra.mrb[0].mxu0 %v918
    %v1048 = vpop.f32.mrb[0].mxu0
    %v1049 = vadd.f32 %v940, %v1048
    %v1050 = vpop.f32.mrb[0].mxu0
    %v1051 = vpop.f32.mrb[0].mxu0
    %v1052 = vadd.f32 %v940, %v1051
    %v1053 = vpop.f32.mrb[0].mxu0
    %1054 = vdwg.mxu0
    %1055 = vst [vmem:[#allocation8] sm:$0xff] %v1025
    %1056 = vst [vmem:[#allocation8 + $0x8] sm:$0xff] %v1028
    %1057 = vst [vmem:[#allocation8 + $0x10] sm:$0xff] %v1033
    %1058 = vst [vmem:[#allocation8 + $0x18] sm:$0xff] %v1036
    %1059 = vst [vmem:[#allocation8 + $0x20] sm:$0xff] %v1041
    %1060 = vst [vmem:[#allocation8 + $0x28] sm:$0xff] %v1044
    %1061 = vst [vmem:[#allocation8 + $0x30] sm:$0xff] %v1049
    %1062 = vst [vmem:[#allocation8 + $0x38] sm:$0xff] %v1052
    // Predicated region
    $region34: #{tpu_custom_call.1} parent=1 // pred_check
      _
    $region35: #{tpu_custom_call.1} parent=1 // pred_check_branch
      %1064 = sbr.rel (0) target = $region37
    $region36: #{tpu_custom_call.1} parent=1 // pred_region
      %s1066 = ssub.s32 1024, 1024
      %1067 = vsyncadd [#allocation4], %s1066
      %s1068 = sshll.u32 [#allocation8], 4
      %s1069 = int_to_ptr.vmem [resolvable:$true] %s1068
      %1074 = dma.vmem_to_hbm [thread:$0]  %s1069, 1024, %s5, [#allocation4], 128, 128, 8
    $region37: #{tpu_custom_call.1} parent=1 // pred_fallthru
      _
    // Predicated region
    $region38: #{tpu_custom_call.1} parent=1 // pred_check
      _
    $region39: #{tpu_custom_call.1} parent=1 // pred_check_branch
      %1076 = sbr.rel (0) target = $region41
    $region40: #{tpu_custom_call.1} parent=1 // pred_region
      %1077 = dma.done [#allocation4], 1024
    $region41: #{tpu_custom_call.1} parent=1 // pred_fallthru
      _
    %1078 = vsyncpa [#allocation3], 1
    %1079 = vsyncpa [#allocation6], 1
    %1080 = vsyncpa [#allocation4], 1

</llo_original>
